<compile_context>
chip_gen: v7x
topology: tpu7x:2x2x1
jax: 0.10.0
libtpu: 0.0.40
codegen_flags: <defaults>
</compile_context>

<pallas_src>
import functools

import jax
import jax.numpy as jnp
from jax.experimental import pallas as pl
from jax.experimental.pallas import tpu as pltpu


NEG_SLOPE = 0.01      # torch.nn.functional.leaky_relu default
BATCH_ALIGN = 16      # bf16 sublane-pack friendly batch alignment
MAX_TILE_B = 2048     # big-batch tile: ~4-5 MB total VMEM, well under every generation's limit


def _leaky_relu(x):
    # Equivalent to where(x > 0, x, slope*x) for slope in (0, 1); cheaper on the VPU.
    return jnp.maximum(x, NEG_SLOPE * x)


def _round_up(n, m):
    return ((n + m - 1) // m) * m


def qnetwork_kernel(x_ref,
                    w1_ref, b1_ref,
                    w2_ref, b2_ref,
                    w3_ref, b3_ref,
                    w4_ref, b4_ref,
                    out_ref):
    # bf16 dot inputs, f32 MXU accumulation; bias-add / activation stay f32,
    # downcast only at the next dot's input and at the final store.
    x = x_ref[...].astype(jnp.bfloat16)                                   # cast in-kernel
    h = jnp.dot(x, w1_ref[...], preferred_element_type=jnp.float32) + b1_ref[...]
    h = _leaky_relu(h).astype(jnp.bfloat16)                               # [tb, 256]
    h = jnp.dot(h, w2_ref[...], preferred_element_type=jnp.float32) + b2_ref[...]
    h = _leaky_relu(h).astype(jnp.bfloat16)                               # [tb, 128]
    h = jnp.dot(h, w3_ref[...], preferred_element_type=jnp.float32) + b3_ref[...]
    h = _leaky_relu(h).astype(jnp.bfloat16)                               # [tb, 64]
    h = jnp.dot(h, w4_ref[...], preferred_element_type=jnp.float32) + b4_ref[...]
    out_ref[...] = h.astype(out_ref.dtype)                                # bf16 [tb, 128]


def prepare_params(params):
    """One-time (per-weight-update) cast/pad of parameters; keep out of the hot path.

    params: list of (w [in,out] f32, b [1,out] f32) per layer.
    Returns (prepared_tuple, action_size).
    """
    (w1, b1), (w2, b2), (w3, b3), (w4, b4) = params
    action_size = w4.shape[1]
    n_pad = _round_up(action_size, 128)           # lane-dense final layer
    w4p = jnp.pad(w4, ((0, 0), (0, n_pad - action_size)))
    b4p = jnp.pad(b4, ((0, 0), (0, n_pad - action_size)))
    prepared = (w1.astype(jnp.bfloat16), b1,
                w2.astype(jnp.bfloat16), b2,
                w3.astype(jnp.bfloat16), b3,
                w4p.astype(jnp.bfloat16), b4p)    # biases stay f32
    return prepared, action_size


def _choose_tile(batch_aligned):
    """Pick a batch tile: big enough to amortize per-step overhead, >=2 tiles when
    possible so both v7x TensorCores get work via dimension_semantics=('parallel',)."""
    if batch_aligned > MAX_TILE_B:
        return MAX_TILE_B                                   # grid >= 2 automatically
    if batch_aligned >= 2 * BATCH_ALIGN:
        return _round_up(pl.cdiv(batch_aligned, 2), BATCH_ALIGN)   # exactly 2 tiles
    return batch_aligned                                    # tiny batch: single tile


@functools.partial(jax.jit, static_argnames=("action_size",))
def qnetwork_forward(x, prepared, *, action_size):
    """x: [B, state_size] f32. prepared: output of prepare_params. Returns [B, action_size]."""
    w1b, b1, w2b, b2, w3b, b3, w4b, b4p = prepared
    B, state_size = x.shape
    n_pad = w4b.shape[1]

    b_aligned = _round_up(B, BATCH_ALIGN)
    tb = _choose_tile(b_aligned)
    b_pad = _round_up(b_aligned, tb)

    x_p = jnp.pad(x, ((0, b_pad - B), (0, 0)))      # f32; bf16 cast happens in-kernel
    grid = (b_pad // tb,)

    def weight_spec(a):
        # full-array block, constant index map -> fetched once, VMEM-resident across tiles
        return pl.BlockSpec(a.shape, lambda i: (0,) * a.ndim)

    out = pl.pallas_call(
        qnetwork_kernel,
        out_shape=jax.ShapeDtypeStruct((b_pad, n_pad), jnp.bfloat16),
        grid=grid,
        in_specs=[
            pl.BlockSpec((tb, state_size), lambda i: (i, 0)),   # x: tiled on batch
            weight_spec(w1b), weight_spec(b1),
            weight_spec(w2b), weight_spec(b2),
            weight_spec(w3b), weight_spec(b3),
            weight_spec(w4b), weight_spec(b4p),
        ],
        out_specs=pl.BlockSpec((tb, n_pad), lambda i: (i, 0)),
        compiler_params=pltpu.CompilerParams(
            # no-op on single-TC v5e/v6e; shards batch tiles across v7x's 2 TCs
            dimension_semantics=("parallel",),
        ),
    )(x_p, w1b, b1, w2b, b2, w3b, b3, w4b, b4p)

    return out[:B, :action_size]


def init_params(key, state_size, action_size):
    """Deterministic init mimicking nn.Linear's U(-1/sqrt(fan_in), 1/sqrt(fan_in))."""
    sizes = [(state_size, 256), (256, 128), (128, 64), (64, action_size)]
    params = []
    for fan_in, fan_out in sizes:
        key, kw, kb = jax.random.split(key, 3)
        bound = 1.0 / (fan_in ** 0.5)
        w = jax.random.uniform(kw, (fan_in, fan_out), jnp.float32, -bound, bound)
        b = jax.random.uniform(kb, (1, fan_out), jnp.float32, -bound, bound)
        params.append((w, b))
    return params


def reference_forward(x, params):
    (w1, b1), (w2, b2), (w3, b3), (w4, b4) = params
    h = _leaky_relu(x @ w1 + b1)
    h = _leaky_relu(h @ w2 + b2)
    h = _leaky_relu(h @ w3 + b3)
    return h @ w4 + b4


if __name__ == "__main__":
    key = jax.random.PRNGKey(0)
    state_size, action_size, batch = 8, 4, 2

    kx, kp, kx2 = jax.random.split(key, 3)
    params = init_params(kp, state_size, action_size)
    prepared, act = prepare_params(params)   # one-time cast/pad, hoisted out of the hot path

    # Small-shape run (B=2): collapses to a single 16-row tile.
    # NOTE: bf16 weights/activations/output lose precision vs the f32 reference; tolerances
    # below reflect that (acceptable for a DQN Q-network, f32 accumulation is preserved).
    x = jax.random.normal(kx, (batch, state_size), dtype=jnp.float32)
    out = qnetwork_forward(x, prepared, action_size=act)
    jax.block_until_ready(out)
    ref = reference_forward(x, params)
    assert out.shape == (batch, action_size)
    assert jnp.allclose(out.astype(jnp.float32), ref, atol=5e-2, rtol=5e-2), "small-batch mismatch"

    # Larger, non-multiple batch: exercises the 2-tile (megacore-friendly) pipelined path.
    x_big = jax.random.normal(kx2, (300, state_size), dtype=jnp.float32)
    out_big = qnetwork_forward(x_big, prepared, action_size=act)
    jax.block_until_ready(out_big)
    ref_big = reference_forward(x_big, params)
    assert out_big.shape == (300, action_size)
    assert jnp.allclose(out_big.astype(jnp.float32), ref_big, atol=5e-2, rtol=5e-2), "tiled-batch mismatch"

    print("KERNEL_OK")
</pallas_src>

<mosaic_0001>
module attributes {stable_mosaic.version = 11 : i64} {
  func.func @qnetwork_kernel(%arg0: i32, %arg1: memref<16x8xf32, #tpu.memory_space<vmem>>, %arg2: memref<8x256xbf16, #tpu.memory_space<vmem>>, %arg3: memref<1x256xf32, #tpu.memory_space<vmem>>, %arg4: memref<256x128xbf16, #tpu.memory_space<vmem>>, %arg5: memref<1x128xf32, #tpu.memory_space<vmem>>, %arg6: memref<128x64xbf16, #tpu.memory_space<vmem>>, %arg7: memref<1x64xf32, #tpu.memory_space<vmem>>, %arg8: memref<64x128xbf16, #tpu.memory_space<vmem>>, %arg9: memref<1x128xf32, #tpu.memory_space<vmem>>, %arg10: memref<16x128xbf16, #tpu.memory_space<vmem>>) attributes {dimension_semantics = [#tpu.dimension_semantics<parallel>], iteration_bounds = array<i64: 1>, scalar_prefetch = 0 : i64, scratch_operands = 0 : i64, tpu.core_type = #tpu.core_type<tc>, window_params = [{transform_indices = @transform_0, window_bounds = array<i64: 16, 8>}, {pipeline_mode = #tpu.pipeline_mode<synchronous>, transform_indices = @transform_1, window_bounds = array<i64: 8, 256>}, {pipeline_mode = #tpu.pipeline_mode<synchronous>, transform_indices = @transform_2, window_bounds = array<i64: 1, 256>}, {pipeline_mode = #tpu.pipeline_mode<synchronous>, transform_indices = @transform_3, window_bounds = array<i64: 256, 128>}, {pipeline_mode = #tpu.pipeline_mode<synchronous>, transform_indices = @transform_4, window_bounds = array<i64: 1, 128>}, {pipeline_mode = #tpu.pipeline_mode<synchronous>, transform_indices = @transform_5, window_bounds = array<i64: 128, 64>}, {pipeline_mode = #tpu.pipeline_mode<synchronous>, transform_indices = @transform_6, window_bounds = array<i64: 1, 64>}, {pipeline_mode = #tpu.pipeline_mode<synchronous>, transform_indices = @transform_7, window_bounds = array<i64: 64, 128>}, {pipeline_mode = #tpu.pipeline_mode<synchronous>, transform_indices = @transform_8, window_bounds = array<i64: 1, 128>}, {transform_indices = @transform_9, window_bounds = array<i64: 16, 128>}]} {
    %c0 = arith.constant 0 : index
    %c0_0 = arith.constant 0 : index
    %0 = vector.load %arg1[%c0, %c0_0] : memref<16x8xf32, #tpu.memory_space<vmem>>, vector<16x8xf32>
    %1 = arith.truncf %0 : vector<16x8xf32> to vector<16x8xbf16>
    %c0_1 = arith.constant 0 : index
    %c0_2 = arith.constant 0 : index
    %2 = vector.load %arg2[%c0_1, %c0_2] : memref<8x256xbf16, #tpu.memory_space<vmem>>, vector<8x256xbf16>
    %cst = arith.constant dense<0.000000e+00> : vector<16x256xf32>
    %3 = tpu.matmul %1, %2, %cst {dimension_numbers = #tpu.dot_dimension_numbers<[1], [0], [0], [1], [0, 0, 1, 1], [], []>} : vector<16x8xbf16>, vector<8x256xbf16>, vector<16x256xf32> -> vector<16x256xf32>
    %c0_3 = arith.constant 0 : index
    %c0_4 = arith.constant 0 : index
    %4 = vector.load %arg3[%c0_3, %c0_4] : memref<1x256xf32, #tpu.memory_space<vmem>>, vector<1x256xf32>
    %5 = vector.broadcast %4 : vector<1x256xf32> to vector<16x256xf32>
    %6 = arith.addf %3, %5 : vector<16x256xf32>
    %cst_5 = arith.constant 0.00999999977 : f32
    %7 = vector.broadcast %cst_5 : f32 to vector<16x256xf32>
    %8 = arith.mulf %7, %6 : vector<16x256xf32>
    %9 = arith.maximumf %6, %8 : vector<16x256xf32>
    %10 = arith.truncf %9 : vector<16x256xf32> to vector<16x256xbf16>
    %c0_6 = arith.constant 0 : index
    %c0_7 = arith.constant 0 : index
    %11 = vector.load %arg4[%c0_6, %c0_7] : memref<256x128xbf16, #tpu.memory_space<vmem>>, vector<256x128xbf16>
    %cst_8 = arith.constant dense<0.000000e+00> : vector<16x128xf32>
    %12 = tpu.matmul %10, %11, %cst_8 {dimension_numbers = #tpu.dot_dimension_numbers<[1], [0], [0], [1], [0, 0, 1, 1], [], []>} : vector<16x256xbf16>, vector<256x128xbf16>, vector<16x128xf32> -> vector<16x128xf32>
    %c0_9 = arith.constant 0 : index
    %c0_10 = arith.constant 0 : index
    %13 = vector.load %arg5[%c0_9, %c0_10] : memref<1x128xf32, #tpu.memory_space<vmem>>, vector<1x128xf32>
    %14 = vector.broadcast %13 : vector<1x128xf32> to vector<16x128xf32>
    %15 = arith.addf %12, %14 : vector<16x128xf32>
    %cst_11 = arith.constant 0.00999999977 : f32
    %16 = vector.broadcast %cst_11 : f32 to vector<16x128xf32>
    %17 = arith.mulf %16, %15 : vector<16x128xf32>
    %18 = arith.maximumf %15, %17 : vector<16x128xf32>
    %19 = arith.truncf %18 : vector<16x128xf32> to vector<16x128xbf16>
    %c0_12 = arith.constant 0 : index
    %c0_13 = arith.constant 0 : index
    %20 = vector.load %arg6[%c0_12, %c0_13] : memref<128x64xbf16, #tpu.memory_space<vmem>>, vector<128x64xbf16>
    %cst_14 = arith.constant dense<0.000000e+00> : vector<16x64xf32>
    %21 = tpu.matmul %19, %20, %cst_14 {dimension_numbers = #tpu.dot_dimension_numbers<[1], [0], [0], [1], [0, 0, 1, 1], [], []>} : vector<16x128xbf16>, vector<128x64xbf16>, vector<16x64xf32> -> vector<16x64xf32>
    %c0_15 = arith.constant 0 : index
    %c0_16 = arith.constant 0 : index
    %22 = vector.load %arg7[%c0_15, %c0_16] : memref<1x64xf32, #tpu.memory_space<vmem>>, vector<1x64xf32>
    %23 = vector.broadcast %22 : vector<1x64xf32> to vector<16x64xf32>
    %24 = arith.addf %21, %23 : vector<16x64xf32>
    %cst_17 = arith.constant 0.00999999977 : f32
    %25 = vector.broadcast %cst_17 : f32 to vector<16x64xf32>
    %26 = arith.mulf %25, %24 : vector<16x64xf32>
    %27 = arith.maximumf %24, %26 : vector<16x64xf32>
    %28 = arith.truncf %27 : vector<16x64xf32> to vector<16x64xbf16>
    %c0_18 = arith.constant 0 : index
    %c0_19 = arith.constant 0 : index
    %29 = vector.load %arg8[%c0_18, %c0_19] : memref<64x128xbf16, #tpu.memory_space<vmem>>, vector<64x128xbf16>
    %cst_20 = arith.constant dense<0.000000e+00> : vector<16x128xf32>
    %30 = tpu.matmul %28, %29, %cst_20 {dimension_numbers = #tpu.dot_dimension_numbers<[1], [0], [0], [1], [0, 0, 1, 1], [], []>} : vector<16x64xbf16>, vector<64x128xbf16>, vector<16x128xf32> -> vector<16x128xf32>
    %c0_21 = arith.constant 0 : index
    %c0_22 = arith.constant 0 : index
    %31 = vector.load %arg9[%c0_21, %c0_22] : memref<1x128xf32, #tpu.memory_space<vmem>>, vector<1x128xf32>
    %32 = vector.broadcast %31 : vector<1x128xf32> to vector<16x128xf32>
    %33 = arith.addf %30, %32 : vector<16x128xf32>
    %34 = arith.truncf %33 : vector<16x128xf32> to vector<16x128xbf16>
    %c0_23 = arith.constant 0 : index
    %c0_24 = arith.constant 0 : index
    %35 = vector.load %arg10[%c0_23, %c0_24] : memref<16x128xbf16, #tpu.memory_space<vmem>>, vector<16x128xbf16>
    tpu.vector_store %arg10[%c0_23, %c0_24], %34 {strides = array<i32>} : memref<16x128xbf16, #tpu.memory_space<vmem>>, vector<16x128xbf16>,
    return
  }
  func.func @transform_0(%arg0: i32) -> (i32, i32) {
    %c0_i32 = arith.constant 0 : i32
    %c0_i32_0 = arith.constant 0 : i32
    return %arg0, %c0_i32 : i32, i32
  }
  func.func @transform_1(%arg0: i32) -> (i32, i32) {
    %c0_i32 = arith.constant 0 : i32
    %c0_i32_0 = arith.constant 0 : i32
    %c0_i32_1 = arith.constant 0 : i32
    return %c0_i32, %c0_i32_0 : i32, i32
  }
  func.func @transform_2(%arg0: i32) -> (i32, i32) {
    %c0_i32 = arith.constant 0 : i32
    %c0_i32_0 = arith.constant 0 : i32
    %c0_i32_1 = arith.constant 0 : i32
    return %c0_i32, %c0_i32_0 : i32, i32
  }
  func.func @transform_3(%arg0: i32) -> (i32, i32) {
    %c0_i32 = arith.constant 0 : i32
    %c0_i32_0 = arith.constant 0 : i32
    %c0_i32_1 = arith.constant 0 : i32
    return %c0_i32, %c0_i32_0 : i32, i32
  }
  func.func @transform_4(%arg0: i32) -> (i32, i32) {
    %c0_i32 = arith.constant 0 : i32
    %c0_i32_0 = arith.constant 0 : i32
    %c0_i32_1 = arith.constant 0 : i32
    return %c0_i32, %c0_i32_0 : i32, i32
  }
  func.func @transform_5(%arg0: i32) -> (i32, i32) {
    %c0_i32 = arith.constant 0 : i32
    %c0_i32_0 = arith.constant 0 : i32
    %c0_i32_1 = arith.constant 0 : i32
    return %c0_i32, %c0_i32_0 : i32, i32
  }
  func.func @transform_6(%arg0: i32) -> (i32, i32) {
    %c0_i32 = arith.constant 0 : i32
    %c0_i32_0 = arith.constant 0 : i32
    %c0_i32_1 = arith.constant 0 : i32
    return %c0_i32, %c0_i32_0 : i32, i32
  }
  func.func @transform_7(%arg0: i32) -> (i32, i32) {
    %c0_i32 = arith.constant 0 : i32
    %c0_i32_0 = arith.constant 0 : i32
    %c0_i32_1 = arith.constant 0 : i32
    return %c0_i32, %c0_i32_0 : i32, i32
  }
  func.func @transform_8(%arg0: i32) -> (i32, i32) {
    %c0_i32 = arith.constant 0 : i32
    %c0_i32_0 = arith.constant 0 : i32
    %c0_i32_1 = arith.constant 0 : i32
    return %c0_i32, %c0_i32_0 : i32, i32
  }
  func.func @transform_9(%arg0: i32) -> (i32, i32) {
    %c0_i32 = arith.constant 0 : i32
    %c0_i32_0 = arith.constant 0 : i32
    return %arg0, %c0_i32 : i32, i32
  }
}

</mosaic_0001>

<llo_original>
// kernel: qnetwork_forward.1
$region0: #{qnetwork_forward.1}
  #allocation0 [shape = 'u32[]', space=smem, size = 0x4, offset = 0x4, fixed_abs, tag = 'smem constant byte address 0x4 - core index']
  #allocation1 [shape = 'u32[144,128]{1,0:T(1,128)}', space=vmem, size = 0x12000, scoped, tag = 'internal scratch']
  %s0 = inlined_call_operand.vmem [shape: f32[16,8], index: 0, kind: input, shape index: {}]
  %s1 = inlined_call_operand.vmem [shape: bf16[8,256], index: 1, kind: input, shape index: {}]
  %s2 = inlined_call_operand.vmem [shape: f32[1,256], index: 2, kind: input, shape index: {}]
  %s3 = inlined_call_operand.hbm [shape: bf16[256,128], index: 3, kind: input, shape index: {}]
  %s4 = inlined_call_operand.vmem [shape: f32[1,128], index: 4, kind: input, shape index: {}]
  %s5 = inlined_call_operand.vmem [shape: bf16[128,64], index: 5, kind: input, shape index: {}]
  %s6 = inlined_call_operand.vmem [shape: f32[1,64], index: 6, kind: input, shape index: {}]
  %s7 = inlined_call_operand.vmem [shape: bf16[64,128], index: 7, kind: input, shape index: {}]
  %s8 = inlined_call_operand.vmem [shape: f32[1,128], index: 8, kind: input, shape index: {}]
  %s9 = inlined_call_operand.vmem [shape: bf16[16,128], index: 9, kind: output, shape index: {}]
  %s10 = sld [smem:[#allocation0]]
  $region50: #{qnetwork_forward.1} parent=0
    _
  %s12 = ssub.s32 1, %s10
  %s13 = scalar_select 0, %s12, %s10
  $region1: #{qnetwork_forward.1} parent=0
    #allocation2 [shape = 'u8[65536]{0}', space=vmem, size = 0x10000, scoped, tag = 'input window, operand 3, single buffered']
    #allocation3 [shape = 's32[1]{0}', space=sflag, size = 0x4, scoped, tag = 'scoped memory for qnetwork_forward.1']
    %14 = vsyncpa [#allocation3], 0
    // Predicated region
    $region2: #{qnetwork_forward.1} parent=1 // pred_check
      _
    $region3: #{qnetwork_forward.1} parent=1 // pred_check_branch
      %16 = sbr.rel (0) target = $region5
    $region4: #{qnetwork_forward.1} parent=1 // pred_region
      _
    $region5: #{qnetwork_forward.1} parent=1 // pred_fallthru
      _
    // Predicated region
    $region6: #{qnetwork_forward.1} parent=1 // pred_check
      _
    $region7: #{qnetwork_forward.1} parent=1 // pred_check_branch
      %18 = sbr.rel (0) target = $region9
    $region8: #{qnetwork_forward.1} parent=1 // pred_region
      _
    $region9: #{qnetwork_forward.1} parent=1 // pred_fallthru
      _
    // Predicated region
    $region10: #{qnetwork_forward.1} parent=1 // pred_check
      _
    $region11: #{qnetwork_forward.1} parent=1 // pred_check_branch
      %20 = sbr.rel (0) target = $region13
    $region12: #{qnetwork_forward.1} parent=1 // pred_region
      _
    $region13: #{qnetwork_forward.1} parent=1 // pred_fallthru
      _
    // Predicated region
    $region14: #{qnetwork_forward.1} parent=1 // pred_check
      _
    $region15: #{qnetwork_forward.1} parent=1 // pred_check_branch
      %22 = sbr.rel (0) target = $region17
    $region16: #{qnetwork_forward.1} parent=1 // pred_region
      %s24 = ssub.s32 2048, 2048
      %25 = vsyncadd [#allocation3], %s24
      %s26 = sshll.u32 [#allocation2], 4
      %s27 = int_to_ptr.vmem [resolvable:$true] %s26
      %32 = dma.hbm_to_vmem [thread:$0]  %s3, 2048, %s27, [#allocation3], 64, 64, 4
    $region17: #{qnetwork_forward.1} parent=1 // pred_fallthru
      _
    // Predicated region
    $region18: #{qnetwork_forward.1} parent=1 // pred_check
      _
    $region19: #{qnetwork_forward.1} parent=1 // pred_check_branch
      %34 = sbr.rel (0) target = $region21
    $region20: #{qnetwork_forward.1} parent=1 // pred_region
      _
    $region21: #{qnetwork_forward.1} parent=1 // pred_fallthru
      _
    // Predicated region
    $region22: #{qnetwork_forward.1} parent=1 // pred_check
      _
    $region23: #{qnetwork_forward.1} parent=1 // pred_check_branch
      %36 = sbr.rel (0) target = $region25
    $region24: #{qnetwork_forward.1} parent=1 // pred_region
      _
    $region25: #{qnetwork_forward.1} parent=1 // pred_fallthru
      _
    // Predicated region
    $region26: #{qnetwork_forward.1} parent=1 // pred_check
      _
    $region27: #{qnetwork_forward.1} parent=1 // pred_check_branch
      %38 = sbr.rel (0) target = $region29
    $region28: #{qnetwork_forward.1} parent=1 // pred_region
      _
    $region29: #{qnetwork_forward.1} parent=1 // pred_fallthru
      _
    // Predicated region
    $region30: #{qnetwork_forward.1} parent=1 // pred_check
      _
    $region31: #{qnetwork_forward.1} parent=1 // pred_check_branch
      %40 = sbr.rel (0) target = $region33
    $region32: #{qnetwork_forward.1} parent=1 // pred_region
      _
    $region33: #{qnetwork_forward.1} parent=1 // pred_fallthru
      _
    // Predicated region
    $region34: #{qnetwork_forward.1} parent=1 // pred_check
      _
    $region35: #{qnetwork_forward.1} parent=1 // pred_check_branch
      %42 = sbr.rel (0) target = $region37
    $region36: #{qnetwork_forward.1} parent=1 // pred_region
      _
    $region37: #{qnetwork_forward.1} parent=1 // pred_fallthru
      _
    // Predicated region
    $region38: #{qnetwork_forward.1} parent=1 // pred_check
      _
    $region39: #{qnetwork_forward.1} parent=1 // pred_check_branch
      %44 = sbr.rel (0) target = $region41
    $region40: #{qnetwork_forward.1} parent=1 // pred_region
      %45 = dma.done [#allocation3], 2048
    $region41: #{qnetwork_forward.1} parent=1 // pred_fallthru
      _
    %v47 = vld [vmem:[%s0] sm:$0xff]
    %v48 = vld [vmem:[%s0 + $0x8] sm:$0xff]
    %v49 = vpack.c.bf16 %v48, %v47
    %v50 = vld [vmem:[%s1] sm:$0xff]
    %v51 = vld [vmem:[%s2] sm:$0x3]
    %v53 = vlaneseq
    %v54 = vshrl.u32 %v53, 7
    %v55 = vsub.s32 0, %v54
    %v56 = vrot.slane %v51, %v55
    %v57 = vlaneseq
    %v58 = vshrl.u32 %v57, 7
    %v59 = vsub.s32 1, %v58
    %v60 = vrot.slane %v51, %v59
    %v64 = vunpack.c.l.b16 %v50
    %v65 = vunpack.c.h.b16 %v50
    %v66 = vpack.c.b16 %v64, %v64
    %v67 = vpack.c.b16 %v65, %v65
    %vm68 = vcmask 64512
    %v70 = vsel %vm68, %v49, 0
    %vm72 = vcmask 1043456
    %v74 = vsel %vm72, %v66, 0
    %v77 = vsel %vm72, %v67, 0
    %79 = vmatprep.subr.bf16.mxu0 %v77
    %80 = vmatpush1.bf16.msra.mxu0 %v74
    %81 = vmatprep.subr.bf16.mxu0 0
    %82 = vmatpush1.bf16.msra.mxu0 0
    %83 = vmatprep.subr.bf16.mxu0 0
    %84 = vmatpush1.bf16.msra.mxu0 0
    %85 = vmatprep.subr.bf16.mxu0 0
    %86 = vmatpush1.bf16.msra.mxu0 0
    %87 = vmatprep.subr.bf16.mxu0 0
    %88 = vmatpush1.bf16.msra.mxu0 0
    %89 = vmatprep.subr.bf16.mxu0 0
    %90 = vmatpush1.bf16.msra.mxu0 0
    %91 = vmatprep.subr.bf16.mxu0 0
    %92 = vmatpush1.bf16.msra.mxu0 0
    %93 = vmatprep.subr.bf16.mxu0 0
    %94 = vmatpush1.bf16.msra.mxu0 0
    %95 = vmatprep.subr.bf16.mxu0 0
    %96 = vmatpush1.bf16.msra.mxu0 0
    %97 = vmatprep.subr.bf16.mxu0 0
    %98 = vmatpush1.bf16.msra.mxu0 0
    %99 = vmatprep.subr.bf16.mxu0 0
    %100 = vmatpush1.bf16.msra.mxu0 0
    %101 = vmatprep.subr.bf16.mxu0 0
    %102 = vmatpush1.bf16.msra.mxu0 0
    %103 = vmatprep.subr.bf16.mxu0 0
    %104 = vmatpush1.bf16.msra.mxu0 0
    %105 = vmatprep.subr.bf16.mxu0 0
    %106 = vmatpush1.bf16.msra.mxu0 0
    %107 = vmatprep.subr.bf16.mxu0 0
    %108 = vmatpush1.bf16.msra.mxu0 0
    %109 = vmatprep.subr.bf16.mxu0 0
    %110 = vmatpush1.bf16.msra.mxu0 0
    %111 = vmatprep.mubr.bf16.mxu0 0
    %112 = vmatmul.mubr.bf16.gmra.mrb[0].mxu0 %v70
    %v113 = vpop.f32.mrb[0].mxu0
    %v114 = vadd.f32 %v56, %v113
    %v115 = vpop.f32.mrb[0].mxu0
    %v116 = vadd.f32 %v60, %v115
    %v117 = vpop.f32.mrb[0].mxu0
    %v118 = vadd.f32 %v56, %v117
    %v119 = vpop.f32.mrb[0].mxu0
    %v120 = vadd.f32 %v60, %v119
    %121 = vdwg.mxu0
    %v122 = vmul.f32 %v114, 0.01
    %v123 = vmul.f32 %v116, 0.01
    %v124 = vmul.f32 %v118, 0.01
    %v125 = vmul.f32 %v120, 0.01
    %v126 = vmax.f32 %v114, %v122
    %v127 = vmax.f32 %v116, %v123
    %v128 = vmax.f32 %v118, %v124
    %v129 = vmax.f32 %v120, %v125
    %v130 = vpack.c.bf16 %v128, %v126
    %v131 = vpack.c.bf16 %v129, %v127
    %v132 = vld [vmem:[#allocation2] sm:$0xf]
    %v133 = vld [vmem:[#allocation2 + $0x4] sm:$0xf]
    %v134 = vld [vmem:[#allocation2 + $0x8] sm:$0xf]
    %v135 = vld [vmem:[#allocation2 + $0xc] sm:$0xf]
    %v136 = vld [vmem:[#allocation2 + $0x10] sm:$0xf]
    %v137 = vld [vmem:[#allocation2 + $0x14] sm:$0xf]
    %v138 = vld [vmem:[#allocation2 + $0x18] sm:$0xf]
    %v139 = vld [vmem:[#allocation2 + $0x1c] sm:$0xf]
    %v140 = vld [vmem:[#allocation2 + $0x20] sm:$0xf]
    %v141 = vld [vmem:[#allocation2 + $0x24] sm:$0xf]
    %v142 = vld [vmem:[#allocation2 + $0x28] sm:$0xf]
    %v143 = vld [vmem:[#allocation2 + $0x2c] sm:$0xf]
    %v144 = vld [vmem:[#allocation2 + $0x30] sm:$0xf]
    %v145 = vld [vmem:[#allocation2 + $0x34] sm:$0xf]
    %v146 = vld [vmem:[#allocation2 + $0x38] sm:$0xf]
    %v147 = vld [vmem:[#allocation2 + $0x3c] sm:$0xf]
    %v148 = vld [vmem:[#allocation2 + $0x40] sm:$0xf]
    %v149 = vld [vmem:[#allocation2 + $0x44] sm:$0xf]
    %v150 = vld [vmem:[#allocation2 + $0x48] sm:$0xf]
    %v151 = vld [vmem:[#allocation2 + $0x4c] sm:$0xf]
    %v152 = vld [vmem:[#allocation2 + $0x50] sm:$0xf]
    %v153 = vld [vmem:[#allocation2 + $0x54] sm:$0xf]
    %v154 = vld [vmem:[#allocation2 + $0x58] sm:$0xf]
    %v155 = vld [vmem:[#allocation2 + $0x5c] sm:$0xf]
    %v156 = vld [vmem:[#allocation2 + $0x60] sm:$0xf]
    %v157 = vld [vmem:[#allocation2 + $0x64] sm:$0xf]
    %v158 = vld [vmem:[#allocation2 + $0x68] sm:$0xf]
    %v159 = vld [vmem:[#allocation2 + $0x6c] sm:$0xf]
    %v160 = vld [vmem:[#allocation2 + $0x70] sm:$0xf]
    %v161 = vld [vmem:[#allocation2 + $0x74] sm:$0xf]
    %v162 = vld [vmem:[#allocation2 + $0x78] sm:$0xf]
    %v163 = vld [vmem:[#allocation2 + $0x7c] sm:$0xf]
    %v164 = vld [vmem:[%s4] sm:$0x1]
    %v166 = vlaneseq
    %v167 = vshrl.u32 %v166, 7
    %v168 = vsub.s32 0, %v167
    %v169 = vrot.slane %v164, %v168
    %v203 = vunpack.c.l.b16 %v132
    %v204 = vunpack.c.l.b16 %v133
    %v205 = vunpack.c.l.b16 %v134
    %v206 = vunpack.c.l.b16 %v135
    %v207 = vunpack.c.l.b16 %v136
    %v208 = vunpack.c.l.b16 %v137
    %v209 = vunpack.c.l.b16 %v138
    %v210 = vunpack.c.l.b16 %v139
    %v211 = vunpack.c.l.b16 %v140
    %v212 = vunpack.c.l.b16 %v141
    %v213 = vunpack.c.l.b16 %v142
    %v214 = vunpack.c.l.b16 %v143
    %v215 = vunpack.c.l.b16 %v144
    %v216 = vunpack.c.l.b16 %v145
    %v217 = vunpack.c.l.b16 %v146
    %v218 = vunpack.c.l.b16 %v147
    %v219 = vunpack.c.l.b16 %v148
    %v220 = vunpack.c.l.b16 %v149
    %v221 = vunpack.c.l.b16 %v150
    %v222 = vunpack.c.l.b16 %v151
    %v223 = vunpack.c.l.b16 %v152
    %v224 = vunpack.c.l.b16 %v153
    %v225 = vunpack.c.l.b16 %v154
    %v226 = vunpack.c.l.b16 %v155
    %v227 = vunpack.c.l.b16 %v156
    %v228 = vunpack.c.l.b16 %v157
    %v229 = vunpack.c.l.b16 %v158
    %v230 = vunpack.c.l.b16 %v159
    %v231 = vunpack.c.l.b16 %v160
    %v232 = vunpack.c.l.b16 %v161
    %v233 = vunpack.c.l.b16 %v162
    %v234 = vunpack.c.l.b16 %v163
    %v235 = vpack.c.b16 %v204, %v203
    %v236 = vpack.c.b16 %v206, %v205
    %v237 = vpack.c.b16 %v208, %v207
    %v238 = vpack.c.b16 %v210, %v209
    %v239 = vpack.c.b16 %v212, %v211
    %v240 = vpack.c.b16 %v214, %v213
    %v241 = vpack.c.b16 %v216, %v215
    %v242 = vpack.c.b16 %v218, %v217
    %v243 = vpack.c.b16 %v220, %v219
    %v244 = vpack.c.b16 %v222, %v221
    %v245 = vpack.c.b16 %v224, %v223
    %v246 = vpack.c.b16 %v226, %v225
    %v247 = vpack.c.b16 %v228, %v227
    %v248 = vpack.c.b16 %v230, %v229
    %v249 = vpack.c.b16 %v232, %v231
    %v250 = vpack.c.b16 %v234, %v233
    %267 = vmatprep.subr.bf16.mxu0 0
    %268 = vmatpush1.bf16.msra.mxu0 %v235
    %269 = vmatprep.subr.bf16.mxu0 0
    %270 = vmatpush1.bf16.msra.mxu0 %v236
    %271 = vmatprep.subr.bf16.mxu0 0
    %272 = vmatpush1.bf16.msra.mxu0 %v237
    %273 = vmatprep.subr.bf16.mxu0 0
    %274 = vmatpush1.bf16.msra.mxu0 %v238
    %275 = vmatprep.subr.bf16.mxu0 0
    %276 = vmatpush1.bf16.msra.mxu0 %v239
    %277 = vmatprep.subr.bf16.mxu0 0
    %278 = vmatpush1.bf16.msra.mxu0 %v240
    %279 = vmatprep.subr.bf16.mxu0 0
    %280 = vmatpush1.bf16.msra.mxu0 %v241
    %281 = vmatprep.subr.bf16.mxu0 0
    %282 = vmatpush1.bf16.msra.mxu0 %v242
    %283 = vmatprep.subr.bf16.mxu0 0
    %284 = vmatpush1.bf16.msra.mxu0 %v243
    %285 = vmatprep.subr.bf16.mxu0 0
    %286 = vmatpush1.bf16.msra.mxu0 %v244
    %287 = vmatprep.subr.bf16.mxu0 0
    %288 = vmatpush1.bf16.msra.mxu0 %v245
    %289 = vmatprep.subr.bf16.mxu0 0
    %290 = vmatpush1.bf16.msra.mxu0 %v246
    %291 = vmatprep.subr.bf16.mxu0 0
    %292 = vmatpush1.bf16.msra.mxu0 %v247
    %293 = vmatprep.subr.bf16.mxu0 0
    %294 = vmatpush1.bf16.msra.mxu0 %v248
    %295 = vmatprep.subr.bf16.mxu0 0
    %296 = vmatpush1.bf16.msra.mxu0 %v249
    %297 = vmatprep.subr.bf16.mxu0 0
    %298 = vmatpush1.bf16.msra.mxu0 %v250
    %299 = vmatprep.mubr.bf16.mxu0 %v131
    %300 = vmatmul.mubr.bf16.gmra.mrb[0].mxu0 %v130
    %v301 = vpop.f32.mrb[0].mxu0
    %v302 = vadd.f32 %v169, %v301
    %v303 = vpop.f32.mrb[0].mxu0
    %v304 = vpop.f32.mrb[0].mxu0
    %v305 = vadd.f32 %v169, %v304
    %v306 = vpop.f32.mrb[0].mxu0
    %307 = vdwg.mxu0
    %v308 = vmul.f32 %v302, 0.01
    %v309 = vmul.f32 %v305, 0.01
    %v310 = vmax.f32 %v302, %v308
    %v311 = vmax.f32 %v305, %v309
    %v312 = vpack.c.bf16 %v311, %v310
    %v313 = vld [vmem:[%s5] sm:$0xf]
    %v314 = vld [vmem:[%s5 + $0x4] sm:$0xf]
    %v315 = vld [vmem:[%s5 + $0x8] sm:$0xf]
    %v316 = vld [vmem:[%s5 + $0xc] sm:$0xf]
    %v317 = vld [vmem:[%s5 + $0x10] sm:$0xf]
    %v318 = vld [vmem:[%s5 + $0x14] sm:$0xf]
    %v319 = vld [vmem:[%s5 + $0x18] sm:$0xf]
    %v320 = vld [vmem:[%s5 + $0x1c] sm:$0xf]
    %v321 = vld [vmem:[%s5 + $0x20] sm:$0xf]
    %v322 = vld [vmem:[%s5 + $0x24] sm:$0xf]
    %v323 = vld [vmem:[%s5 + $0x28] sm:$0xf]
    %v324 = vld [vmem:[%s5 + $0x2c] sm:$0xf]
    %v325 = vld [vmem:[%s5 + $0x30] sm:$0xf]
    %v326 = vld [vmem:[%s5 + $0x34] sm:$0xf]
    %v327 = vld [vmem:[%s5 + $0x38] sm:$0xf]
    %v328 = vld [vmem:[%s5 + $0x3c] sm:$0xf]
    %v329 = vld [vmem:[%s6] sm:$0x1]
    %v331 = vlaneseq
    %v332 = vshrl.u32 %v331, 7
    %v333 = vsub.s32 0, %v332
    %v334 = vrot.slane %v329, %v333
    %v352 = vunpack.c.l.b16 %v313
    %v353 = vunpack.c.l.b16 %v314
    %v354 = vunpack.c.l.b16 %v315
    %v355 = vunpack.c.l.b16 %v316
    %v356 = vunpack.c.l.b16 %v317
    %v357 = vunpack.c.l.b16 %v318
    %v358 = vunpack.c.l.b16 %v319
    %v359 = vunpack.c.l.b16 %v320
    %v360 = vunpack.c.l.b16 %v321
    %v361 = vunpack.c.l.b16 %v322
    %v362 = vunpack.c.l.b16 %v323
    %v363 = vunpack.c.l.b16 %v324
    %v364 = vunpack.c.l.b16 %v325
    %v365 = vunpack.c.l.b16 %v326
    %v366 = vunpack.c.l.b16 %v327
    %v367 = vunpack.c.l.b16 %v328
    %v368 = vpack.c.b16 %v353, %v352
    %v369 = vpack.c.b16 %v355, %v354
    %v370 = vpack.c.b16 %v357, %v356
    %v371 = vpack.c.b16 %v359, %v358
    %v372 = vpack.c.b16 %v361, %v360
    %v373 = vpack.c.b16 %v363, %v362
    %v374 = vpack.c.b16 %v365, %v364
    %v375 = vpack.c.b16 %v367, %v366
    %384 = vmatprep.subr.bf16.mxu0 0
    %385 = vmatpush1.bf16.msra.mxu0 %v368
    %386 = vmatprep.subr.bf16.mxu0 0
    %387 = vmatpush1.bf16.msra.mxu0 %v369
    %388 = vmatprep.subr.bf16.mxu0 0
    %389 = vmatpush1.bf16.msra.mxu0 %v370
    %390 = vmatprep.subr.bf16.mxu0 0
    %391 = vmatpush1.bf16.msra.mxu0 %v371
    %392 = vmatprep.subr.bf16.mxu0 0
    %393 = vmatpush1.bf16.msra.mxu0 %v372
    %394 = vmatprep.subr.bf16.mxu0 0
    %395 = vmatpush1.bf16.msra.mxu0 %v373
    %396 = vmatprep.subr.bf16.mxu0 0
    %397 = vmatpush1.bf16.msra.mxu0 %v374
    %398 = vmatprep.subr.bf16.mxu0 0
    %399 = vmatpush1.bf16.msra.mxu0 %v375
    %400 = vmatprep.subr.bf16.mxu0 0
    %401 = vmatpush1.bf16.msra.mxu0 0
    %402 = vmatprep.subr.bf16.mxu0 0
    %403 = vmatpush1.bf16.msra.mxu0 0
    %404 = vmatprep.subr.bf16.mxu0 0
    %405 = vmatpush1.bf16.msra.mxu0 0
    %406 = vmatprep.subr.bf16.mxu0 0
    %407 = vmatpush1.bf16.msra.mxu0 0
    %408 = vmatprep.subr.bf16.mxu0 0
    %409 = vmatpush1.bf16.msra.mxu0 0
    %410 = vmatprep.subr.bf16.mxu0 0
    %411 = vmatpush1.bf16.msra.mxu0 0
    %412 = vmatprep.subr.bf16.mxu0 0
    %413 = vmatpush1.bf16.msra.mxu0 0
    %414 = vmatprep.subr.bf16.mxu0 0
    %415 = vmatpush1.bf16.msra.mxu0 0
    %416 = vmatprep.mubr.bf16.mxu0 0
    %417 = vmatmul.mubr.bf16.gmra.mrb[0].mxu0 %v312
    %v418 = vpop.f32.mrb[0].mxu0
    %v419 = vadd.f32 %v334, %v418
    %v420 = vpop.f32.mrb[0].mxu0
    %v421 = vpop.f32.mrb[0].mxu0
    %v422 = vadd.f32 %v334, %v421
    %v423 = vpop.f32.mrb[0].mxu0
    %424 = vdwg.mxu0
    %v425 = vmul.f32 %v419, 0.01
    %v426 = vmul.f32 %v422, 0.01
    %v427 = vmax.f32 %v419, %v425
    %v428 = vmax.f32 %v422, %v426
    %v429 = vpack.c.bf16 %v428, %v427
    %v430 = vld [vmem:[%s7] sm:$0xf]
    %v431 = vld [vmem:[%s7 + $0x4] sm:$0xf]
    %v432 = vld [vmem:[%s7 + $0x8] sm:$0xf]
    %v433 = vld [vmem:[%s7 + $0xc] sm:$0xf]
    %v434 = vld [vmem:[%s7 + $0x10] sm:$0xf]
    %v435 = vld [vmem:[%s7 + $0x14] sm:$0xf]
    %v436 = vld [vmem:[%s7 + $0x18] sm:$0xf]
    %v437 = vld [vmem:[%s7 + $0x1c] sm:$0xf]
    %v438 = vld [vmem:[%s8] sm:$0x1]
    %v440 = vlaneseq
    %v441 = vshrl.u32 %v440, 7
    %v442 = vsub.s32 0, %v441
    %v443 = vrot.slane %v438, %v442
    %v453 = vunpack.c.l.b16 %v430
    %v454 = vunpack.c.l.b16 %v431
    %v455 = vunpack.c.l.b16 %v432
    %v456 = vunpack.c.l.b16 %v433
    %v457 = vunpack.c.l.b16 %v434
    %v458 = vunpack.c.l.b16 %v435
    %v459 = vunpack.c.l.b16 %v436
    %v460 = vunpack.c.l.b16 %v437
    %v461 = vpack.c.b16 %v454, %v453
    %v462 = vpack.c.b16 %v456, %v455
    %v463 = vpack.c.b16 %v458, %v457
    %v464 = vpack.c.b16 %v460, %v459
    %vm469 = vcmask 523264
    %v471 = vsel %vm469, %v429, 0
    %473 = vmatprep.subr.bf16.mxu0 0
    %474 = vmatpush1.bf16.msra.mxu0 %v461
    %475 = vmatprep.subr.bf16.mxu0 0
    %476 = vmatpush1.bf16.msra.mxu0 %v462
    %477 = vmatprep.subr.bf16.mxu0 0
    %478 = vmatpush1.bf16.msra.mxu0 %v463
    %479 = vmatprep.subr.bf16.mxu0 0
    %480 = vmatpush1.bf16.msra.mxu0 %v464
    %481 = vmatprep.subr.bf16.mxu0 0
    %482 = vmatpush1.bf16.msra.mxu0 0
    %483 = vmatprep.subr.bf16.mxu0 0
    %484 = vmatpush1.bf16.msra.mxu0 0
    %485 = vmatprep.subr.bf16.mxu0 0
    %486 = vmatpush1.bf16.msra.mxu0 0
    %487 = vmatprep.subr.bf16.mxu0 0
    %488 = vmatpush1.bf16.msra.mxu0 0
    %489 = vmatprep.subr.bf16.mxu0 0
    %490 = vmatpush1.bf16.msra.mxu0 0
    %491 = vmatprep.subr.bf16.mxu0 0
    %492 = vmatpush1.bf16.msra.mxu0 0
    %493 = vmatprep.subr.bf16.mxu0 0
    %494 = vmatpush1.bf16.msra.mxu0 0
    %495 = vmatprep.subr.bf16.mxu0 0
    %496 = vmatpush1.bf16.msra.mxu0 0
    %497 = vmatprep.subr.bf16.mxu0 0
    %498 = vmatpush1.bf16.msra.mxu0 0
    %499 = vmatprep.subr.bf16.mxu0 0
    %500 = vmatpush1.bf16.msra.mxu0 0
    %501 = vmatprep.subr.bf16.mxu0 0
    %502 = vmatpush1.bf16.msra.mxu0 0
    %503 = vmatprep.subr.bf16.mxu0 0
    %504 = vmatpush1.bf16.msra.mxu0 0
    %505 = vmatprep.mubr.bf16.mxu0 0
    %506 = vmatmul.mubr.bf16.gmra.mrb[0].mxu0 %v471
    %v507 = vpop.f32.mrb[0].mxu0
    %v508 = vadd.f32 %v443, %v507
    %v509 = vpop.f32.mrb[0].mxu0
    %v510 = vpop.f32.mrb[0].mxu0
    %v511 = vadd.f32 %v443, %v510
    %v512 = vpop.f32.mrb[0].mxu0
    %513 = vdwg.mxu0
    %v514 = vpack.c.bf16 %v511, %v508
    %v516 = vunpack.c.l.b16 %v514
    %v517 = vunpack.c.h.b16 %v514
    %v518 = vpack.c.b16 %v516, %v516
    %v519 = vpack.c.b16 %v517, %v517
    %522 = vst [vmem:[%s9] sm:$0xf] %v518
    %523 = vst [vmem:[%s9 + $0x4] sm:$0xf] %v519
    // Predicated region
    $region42: #{qnetwork_forward.1} parent=1 // pred_check
      _
    $region43: #{qnetwork_forward.1} parent=1 // pred_check_branch
      %525 = sbr.rel (0) target = $region45
    $region44: #{qnetwork_forward.1} parent=1 // pred_region
      _
    $region45: #{qnetwork_forward.1} parent=1 // pred_fallthru
      _
    // Predicated region
    $region46: #{qnetwork_forward.1} parent=1 // pred_check
      _
    $region47: #{qnetwork_forward.1} parent=1 // pred_check_branch
      %527 = sbr.rel (0) target = $region49
    $region48: #{qnetwork_forward.1} parent=1 // pred_region
      _
    $region49: #{qnetwork_forward.1} parent=1 // pred_fallthru
      _
    %528 = vsyncpa [#allocation3], 1

</llo_original>
